<compile_context>
chip_gen: v7x
topology: tpu7x:2x2x1
jax: 0.10.0
libtpu: 0.0.40
codegen_flags: <defaults>
</compile_context>

<pallas_src>
import functools

import jax
import jax.numpy as jnp
from jax import lax
from jax.experimental import pallas as pl
from jax.experimental.pallas import tpu as pltpu

LANE = 128
SUBLANE = 8
CHUNK_ROWS = 512                    # rows per in-kernel compute chunk (f32: 256 KiB)
VMEM_DBUF_BUDGET = 24 << 20         # double-buffered input budget, safe on all gens
_ROW_ALIGN = {1: 32, 2: 16, 4: 8, 8: 8}   # sublane packing per itemsize


def _detect_num_tensorcores():
    """Best-effort TensorCore count (2 on v7x, 1 on v5e/v6e); falls back to 1."""
    try:
        info = pltpu.get_tpu_info()
        for name in ("num_cores", "num_tensorcores", "tensorcore_count",
                     "cores_per_chip", "core_count"):
            v = getattr(info, name, None)
            if isinstance(v, int) and 1 <= v <= 8:
                return v
    except Exception:
        pass
    try:
        v = getattr(jax.devices()[0], "num_cores", None)
        if isinstance(v, int) and 1 <= v <= 8:
            return v
    except Exception:
        pass
    return 1


def _custom_mse_kernel(pred_ref, true_ref, out_ref, *, zero_penalty, tile_rows,
                       chunk_rows, steps_per_core, valid_rows, needs_mask):
    """Accumulate the weighted squared-error sum into a (1, 8, 128) block."""
    p = pl.program_id(0)   # parallel (per-core) axis
    i = pl.program_id(1)   # reduction axis

    @pl.when(i == 0)
    def _():
        out_ref[...] = jnp.zeros_like(out_ref)

    n_chunks = tile_rows // chunk_rows
    # Nominal (unclamped) first row of this grid step; clamped duplicate steps
    # get base >= valid_rows and are fully masked away.
    base = (p * steps_per_core + i) * tile_rows

    def tile_partial_sum(masked):
        def body(c, acc):
            r0 = pl.multiple_of(c * chunk_rows, chunk_rows)
            pred = pred_ref[pl.ds(r0, chunk_rows), :].astype(jnp.float32)
            true = true_ref[pl.ds(r0, chunk_rows), :].astype(jnp.float32)
            diff = pred - true
            sq = diff * diff
            w = 1.0 + zero_penalty * (true == 0.0).astype(jnp.float32)
            loss = sq * w
            if masked:
                row_ids = (base + r0 +
                           lax.broadcasted_iota(jnp.int32, (chunk_rows, LANE), 0))
                # where AFTER the compute: discards NaN/Inf from garbage rows.
                loss = jnp.where(row_ids < valid_rows, loss, 0.0)
            # Sublane-group partial sums: pure VPU vreg adds, no XLU.
            return acc + loss.reshape(chunk_rows // SUBLANE, SUBLANE, LANE).sum(axis=0)

        return lax.fori_loop(0, n_chunks, body,
                             jnp.zeros((SUBLANE, LANE), jnp.float32))

    if needs_mask:
        is_ragged = base + tile_rows > valid_rows

        @pl.when(is_ragged)
        def _():
            out_ref[...] += tile_partial_sum(True).reshape(1, SUBLANE, LANE)

        @pl.when(jnp.logical_not(is_ragged))
        def _():
            out_ref[...] += tile_partial_sum(False).reshape(1, SUBLANE, LANE)
    else:
        out_ref[...] += tile_partial_sum(False).reshape(1, SUBLANE, LANE)


def custom_mse_loss(y_pred, y_true, zero_penalty=2.0, *, tile_rows=8192,
                    num_parallel=None):
    assert y_pred.shape == y_true.shape
    n_elems = int(y_pred.size)
    assert n_elems > 0

    pred_flat = jnp.ravel(y_pred)   # reshape of contiguous input: no copy
    true_flat = jnp.ravel(y_true)

    def _weighted_sq_sum(p, t):
        pf = p.astype(jnp.float32)
        tf = t.astype(jnp.float32)
        d = pf - tf
        sq = d * d
        w = 1.0 + float(zero_penalty) * (tf == 0.0).astype(jnp.float32)
        return jnp.sum(sq * w)

    isz_p = jnp.dtype(y_pred.dtype).itemsize
    isz_t = jnp.dtype(y_true.dtype).itemsize
    row_align = max(_ROW_ALIGN.get(isz_p, 8), _ROW_ALIGN.get(isz_t, 8))

    rows_main = n_elems // LANE
    if rows_main < row_align:
        # Tiny input (< a few KB): below sublane-packing granularity; not worth
        # a kernel launch. Compute directly.
        return _weighted_sq_sum(pred_flat, true_flat) / jnp.float32(n_elems)

    main_elems = rows_main * LANE
    tail_elems = n_elems - main_elems   # < 128 elements, handled in the wrapper

    pred2d = pred_flat[:main_elems].reshape(rows_main, LANE)
    true2d = true_flat[:main_elems].reshape(rows_main, LANE)

    # Tile rows: as large as possible within a conservative cross-generation
    # VMEM budget (2 inputs x 2 buffers must fit with headroom on v7x/v5e).
    bytes_per_row_dbuf = 2 * LANE * (isz_p + isz_t)
    cap_rows = max(row_align, VMEM_DBUF_BUDGET // bytes_per_row_dbuf)

    tile = min(int(tile_rows), cap_rows, rows_main)
    row_mult = 32 if tile >= 32 else row_align
    tile = max((tile // row_mult) * row_mult, row_align)

    chunk = CHUNK_ROWS if tile % CHUNK_ROWS == 0 else tile

    total_steps = pl.cdiv(rows_main, tile)
    if num_parallel is None:
        num_parallel = _detect_num_tensorcores()
    n_par = max(1, min(int(num_parallel), total_steps))
    steps_per_core = pl.cdiv(total_steps, n_par)
    # Mask needed iff some (p, i) grid point nominally reaches past rows_main.
    needs_mask = (n_par * steps_per_core * tile) != rows_main

    def in_map(p, i):
        idx = p * steps_per_core + i
        # Clamp so every block start stays in bounds; clamped duplicates are
        # fully masked inside the kernel (contribute exactly 0).
        return (jnp.minimum(idx, total_steps - 1), 0)

    kernel = functools.partial(
        _custom_mse_kernel,
        zero_penalty=float(zero_penalty),
        tile_rows=tile,
        chunk_rows=chunk,
        steps_per_core=steps_per_core,
        valid_rows=rows_main,
        needs_mask=needs_mask,
    )

    main_bytes = main_elems * (isz_p + isz_t)
    cost = pl.CostEstimate(
        flops=int(7 * main_elems),
        transcendentals=0,
        bytes_accessed=int(main_bytes + n_par * SUBLANE * LANE * 4),
    )

    dbuf_bytes = tile * bytes_per_row_dbuf
    interm_bytes = 8 * chunk * LANE * 4
    vmem_limit = max(32 << 20, min(dbuf_bytes + interm_bytes + (8 << 20), 56 << 20))

    partials = pl.pallas_call(
        kernel,
        out_shape=jax.ShapeDtypeStruct((n_par, SUBLANE, LANE), jnp.float32),
        grid_spec=pltpu.PrefetchScalarGridSpec(
            num_scalar_prefetch=0,
            grid=(n_par, steps_per_core),
            in_specs=[
                pl.BlockSpec((tile, LANE), in_map),
                pl.BlockSpec((tile, LANE), in_map),
            ],
            out_specs=pl.BlockSpec((1, SUBLANE, LANE), lambda p, i: (p, 0, 0)),
        ),
        compiler_params=pltpu.CompilerParams(
            dimension_semantics=("parallel", "arbitrary"),
            vmem_limit_bytes=int(vmem_limit),
        ),
        cost_estimate=cost,
    )(pred2d, true2d)

    total = jnp.sum(partials)
    if tail_elems:
        total = total + _weighted_sq_sum(pred_flat[main_elems:],
                                         true_flat[main_elems:])
    return total / jnp.float32(n_elems)


if __name__ == "__main__":
    key = jax.random.PRNGKey(0)
    k1, k2, k3 = jax.random.split(key, 3)

    def ref_loss(p, t, zp=2.0):
        sq = jnp.square(p - t)
        zm = (t == 0.0).astype(jnp.float32)
        return jnp.mean(sq + zm * zp * sq)

    # 1) Small NCHW-like edge-map prediction shape, lane-aligned, single tile.
    shape = (2, 4, 16, 16)
    y_pred = jax.random.normal(k1, shape, dtype=jnp.float32)
    edges = jax.random.uniform(k2, shape, dtype=jnp.float32)
    mask = jax.random.bernoulli(k3, p=0.3, shape=shape)
    y_true = jnp.where(mask, edges, 0.0)

    loss = custom_mse_loss(y_pred, y_true, zero_penalty=2.0)
    loss = jax.block_until_ready(loss)
    ref = ref_loss(y_pred, y_true, 2.0)
    assert jnp.allclose(loss, ref, rtol=1e-5, atol=1e-6), (loss, ref)

    # 2) Lane-aligned but row-ragged: multi-block grid, pl.when-gated mask,
    #    clamped duplicate steps if a parallel split is active.
    shape2 = (2, 3, 40, 40)
    y_pred2 = jax.random.normal(k1, shape2, dtype=jnp.float32)
    y_true2 = jnp.where(jax.random.bernoulli(k3, p=0.3, shape=shape2),
                        jax.random.uniform(k2, shape2, dtype=jnp.float32), 0.0)
    loss2 = custom_mse_loss(y_pred2, y_true2, zero_penalty=2.0, tile_rows=16)
    loss2 = jax.block_until_ready(loss2)
    ref2 = ref_loss(y_pred2, y_true2, 2.0)
    assert jnp.allclose(loss2, ref2, rtol=1e-5, atol=1e-5), (loss2, ref2)

    # 3) Not lane-aligned: exercises the wrapper-side tail fold (no jnp.pad)
    #    plus the ragged last block in the kernel.
    shape3 = (2, 4, 15, 15)
    y_pred3 = jax.random.normal(k1, shape3, dtype=jnp.float32)
    y_true3 = jnp.where(jax.random.bernoulli(k3, p=0.3, shape=shape3),
                        jax.random.uniform(k2, shape3, dtype=jnp.float32), 0.0)
    loss3 = custom_mse_loss(y_pred3, y_true3, zero_penalty=2.0)
    loss3 = jax.block_until_ready(loss3)
    ref3 = ref_loss(y_pred3, y_true3, 2.0)
    assert jnp.allclose(loss3, ref3, rtol=1e-5, atol=1e-6), (loss3, ref3)

    print("KERNEL_OK")
</pallas_src>

<mosaic_0001>
module attributes {stable_mosaic.version = 11 : i64} {
  func.func @_custom_mse_kernel(%arg0: i32, %arg1: i32, %arg2: memref<16x128xf32, #tpu.memory_space<vmem>>, %arg3: memref<16x128xf32, #tpu.memory_space<vmem>>, %arg4: memref<1x8x128xf32, #tpu.memory_space<vmem>>) attributes {dimension_semantics = [#tpu.dimension_semantics<parallel>, #tpu.dimension_semantics<arbitrary>], iteration_bounds = array<i64: 1, 1>, scalar_prefetch = 0 : i64, scratch_operands = 0 : i64, tpu.core_type = #tpu.core_type<tc>, window_params = [{transform_indices = @transform_0, window_bounds = array<i64: 16, 128>}, {transform_indices = @transform_1, window_bounds = array<i64: 16, 128>}, {transform_indices = @transform_2, window_bounds = array<i64: 1, 8, 128>}]} {
    %c0_i32 = arith.constant 0 : i32
    %0 = arith.cmpi eq, %arg1, %c0_i32 : i32
    %1 = arith.extui %0 : i1 to i32
    %c0_i32_0 = arith.constant 0 : i32
    %2 = arith.cmpi ne, %1, %c0_i32_0 : i32
    scf.if %2 {
      %cst_13 = arith.constant 0.000000e+00 : f32
      %28 = vector.broadcast %cst_13 : f32 to vector<1x8x128xf32>
      %c0_14 = arith.constant 0 : index
      %c0_15 = arith.constant 0 : index
      %c0_16 = arith.constant 0 : index
      %29 = vector.load %arg4[%c0_14, %c0_15, %c0_16] : memref<1x8x128xf32, #tpu.memory_space<vmem>>, vector<1x8x128xf32>
      tpu.vector_store %arg4[%c0_14, %c0_15, %c0_16], %28 {strides = array<i32>} : memref<1x8x128xf32, #tpu.memory_space<vmem>>, vector<1x8x128xf32>,
    } else {
    }
    %c0 = arith.constant 0 : index
    %c0_1 = arith.constant 0 : index
    %c0_2 = arith.constant 0 : index
    %3 = vector.load %arg4[%c0, %c0_1, %c0_2] : memref<1x8x128xf32, #tpu.memory_space<vmem>>, vector<1x8x128xf32>
    %cst = arith.constant 0.000000e+00 : f32
    %4 = vector.broadcast %cst : f32 to vector<8x128xf32>
    %c0_i32_3 = arith.constant 0 : i32
    %c16_i32 = arith.constant 16 : i32
    %5 = arith.muli %c0_i32_3, %c16_i32 : i32
    %6 = tpu.assume_multiple %5, 16 : i32
    %7 = arith.index_cast %6 : i32 to index
    %c0_4 = arith.constant 0 : index
    %8 = vector.load %arg2[%7, %c0_4] : memref<16x128xf32, #tpu.memory_space<vmem>>, vector<16x128xf32>
    %9 = arith.index_cast %6 : i32 to index
    %c0_5 = arith.constant 0 : index
    %10 = vector.load %arg3[%9, %c0_5] : memref<16x128xf32, #tpu.memory_space<vmem>>, vector<16x128xf32>
    %11 = arith.subf %8, %10 : vector<16x128xf32>
    %12 = arith.mulf %11, %11 : vector<16x128xf32>
    %cst_6 = arith.constant 0.000000e+00 : f32
    %13 = vector.broadcast %cst_6 : f32 to vector<16x128xf32>
    %14 = arith.cmpf oeq, %10, %13 : vector<16x128xf32>
    %15 = arith.extui %14 : vector<16x128xi1> to vector<16x128xi32>
    %16 = arith.sitofp %15 : vector<16x128xi32> to vector<16x128xf32>
    %cst_7 = arith.constant 2.000000e+00 : f32
    %17 = vector.broadcast %cst_7 : f32 to vector<16x128xf32>
    %18 = arith.mulf %17, %16 : vector<16x128xf32>
    %cst_8 = arith.constant 1.000000e+00 : f32
    %19 = vector.broadcast %cst_8 : f32 to vector<16x128xf32>
    %20 = arith.addf %19, %18 : vector<16x128xf32>
    %21 = arith.mulf %12, %20 : vector<16x128xf32>
    %22 = vector.shape_cast %21 : vector<16x128xf32> to vector<2x8x128xf32>
    %cst_9 = arith.constant dense<0.000000e+00> : vector<8x128xf32>
    %23 = vector.multi_reduction <add>, %22, %cst_9 [0] : vector<2x8x128xf32> to vector<8x128xf32>
    %24 = arith.addf %4, %23 : vector<8x128xf32>
    %c1_i32 = arith.constant 1 : i32
    %25 = vector.shape_cast %24 : vector<8x128xf32> to vector<1x8x128xf32>
    %26 = arith.addf %3, %25 : vector<1x8x128xf32>
    %c0_10 = arith.constant 0 : index
    %c0_11 = arith.constant 0 : index
    %c0_12 = arith.constant 0 : index
    %27 = vector.load %arg4[%c0_10, %c0_11, %c0_12] : memref<1x8x128xf32, #tpu.memory_space<vmem>>, vector<1x8x128xf32>
    tpu.vector_store %arg4[%c0_10, %c0_11, %c0_12], %26 {strides = array<i32>} : memref<1x8x128xf32, #tpu.memory_space<vmem>>, vector<1x8x128xf32>,
    return
  }
  func.func @transform_0(%arg0: i32, %arg1: i32) -> (i32, i32) {
    %c1_i32 = arith.constant 1 : i32
    %0 = arith.muli %arg0, %c1_i32 : i32
    %1 = arith.addi %0, %arg1 : i32
    %c0_i32 = arith.constant 0 : i32
    %2 = arith.minsi %1, %c0_i32 : i32
    %c0_i32_0 = arith.constant 0 : i32
    %c0_i32_1 = arith.constant 0 : i32
    return %2, %c0_i32_0 : i32, i32
  }
  func.func @transform_1(%arg0: i32, %arg1: i32) -> (i32, i32) {
    %c1_i32 = arith.constant 1 : i32
    %0 = arith.muli %arg0, %c1_i32 : i32
    %1 = arith.addi %0, %arg1 : i32
    %c0_i32 = arith.constant 0 : i32
    %2 = arith.minsi %1, %c0_i32 : i32
    %c0_i32_0 = arith.constant 0 : i32
    %c0_i32_1 = arith.constant 0 : i32
    return %2, %c0_i32_0 : i32, i32
  }
  func.func @transform_2(%arg0: i32, %arg1: i32) -> (i32, i32, i32) {
    %c0_i32 = arith.constant 0 : i32
    %c0_i32_0 = arith.constant 0 : i32
    %c0_i32_1 = arith.constant 0 : i32
    return %arg0, %c0_i32, %c0_i32_0 : i32, i32, i32
  }
}

</mosaic_0001>

<llo_original>
// kernel: tpu_custom_call.1
$region0: #{tpu_custom_call.1}
  #allocation0 [shape = 'u32[]', space=smem, size = 0x4, offset = 0x4, fixed_abs, tag = 'smem constant byte address 0x4 - core index']
  #allocation1 [shape = 'u32[144,128]{1,0:T(1,128)}', space=vmem, size = 0x12000, scoped, tag = 'internal scratch']
  %s0 = inlined_call_operand.hbm [shape: f32[16,128], index: 0, kind: input, shape index: {}]
  %s1 = inlined_call_operand.hbm [shape: f32[16,128], index: 1, kind: input, shape index: {}]
  %s2 = inlined_call_operand.hbm [shape: f32[1,8,128], index: 2, kind: output, shape index: {}]
  %s3 = sld [smem:[#allocation0]]
  $region30: #{tpu_custom_call.1} parent=0
    _
  %s5 = ssub.s32 1, %s3
  %s6 = scalar_select 0, %s5, %s3
  $region1: #{tpu_custom_call.1} parent=0
    #allocation2 [shape = 'u8[8192]{0}', space=vmem, size = 0x2000, scoped, tag = 'input window, operand 0, single buffered']
    #allocation3 [shape = 's32[1]{0}', space=sflag, size = 0x4, scoped, tag = 'scoped memory for tpu_custom_call.1']
    #allocation4 [shape = 's32[1]{0}', space=sflag, size = 0x4, scoped, tag = 'scoped memory for tpu_custom_call.1']
    #allocation5 [shape = 'u8[8192]{0}', space=vmem, size = 0x2000, scoped, tag = 'input window, operand 1, single buffered']
    #allocation6 [shape = 's32[1]{0}', space=sflag, size = 0x4, scoped, tag = 'scoped memory for tpu_custom_call.1']
    #allocation7 [shape = 'u8[4096]{0}', space=vmem, size = 0x1000, scoped, tag = 'output window, operand 0, single buffered']
    %7 = vsyncpa [#allocation3], 0
    %8 = vsyncpa [#allocation6], 0
    %9 = vsyncpa [#allocation4], 0
    // Predicated region
    $region2: #{tpu_custom_call.1} parent=1 // pred_check
      _
    $region3: #{tpu_custom_call.1} parent=1 // pred_check_branch
      %11 = sbr.rel (0) target = $region5
    $region4: #{tpu_custom_call.1} parent=1 // pred_region
      %s12 = sadd.s32 0, 0
      %p13 = scmp.lt.s32.totalorder %s12, 0
      %s14 = scalar_select %p13, %s12, 0
      %s15 = smul.u32 2, %s14
      %s17 = ssub.s32 256, 256
      %18 = vsyncadd [#allocation3], %s17
      %s19 = smul.addr %s15, 128
      %s20 = scalar_lea.hbm %s0, %s19
      %s21 = sshll.u32 [#allocation2], 4
      %s22 = int_to_ptr.vmem [resolvable:$true] %s21
      %27 = dma.hbm_to_vmem [thread:$0]  %s20, 256, %s22, [#allocation3], 128, 128, 8
    $region5: #{tpu_custom_call.1} parent=1 // pred_fallthru
      _
    // Predicated region
    $region6: #{tpu_custom_call.1} parent=1 // pred_check
      _
    $region7: #{tpu_custom_call.1} parent=1 // pred_check_branch
      %29 = sbr.rel (0) target = $region9
    $region8: #{tpu_custom_call.1} parent=1 // pred_region
      %s30 = sadd.s32 0, 0
      %p31 = scmp.lt.s32.totalorder %s30, 0
      %s32 = scalar_select %p31, %s30, 0
      %s33 = smul.u32 2, %s32
      %s35 = ssub.s32 256, 256
      %36 = vsyncadd [#allocation6], %s35
      %s37 = smul.addr %s33, 128
      %s38 = scalar_lea.hbm %s1, %s37
      %s39 = sshll.u32 [#allocation5], 4
      %s40 = int_to_ptr.vmem [resolvable:$true] %s39
      %45 = dma.hbm_to_vmem [thread:$0]  %s38, 256, %s40, [#allocation6], 128, 128, 8
    $region9: #{tpu_custom_call.1} parent=1 // pred_fallthru
      _
    // Predicated region
    $region10: #{tpu_custom_call.1} parent=1 // pred_check
      _
    $region11: #{tpu_custom_call.1} parent=1 // pred_check_branch
      %47 = sbr.rel (0) target = $region13
    $region12: #{tpu_custom_call.1} parent=1 // pred_region
      %48 = dma.done [#allocation3], 256
    $region13: #{tpu_custom_call.1} parent=1 // pred_fallthru
      _
    // Predicated region
    $region14: #{tpu_custom_call.1} parent=1 // pred_check
      _
    $region15: #{tpu_custom_call.1} parent=1 // pred_check_branch
      %50 = sbr.rel (0) target = $region17
    $region16: #{tpu_custom_call.1} parent=1 // pred_region
      %51 = dma.done [#allocation6], 256
    $region17: #{tpu_custom_call.1} parent=1 // pred_fallthru
      _
    %s52 = sadd.s32 0, 0
    %p53 = scmp.lt.s32.totalorder %s52, 0
    %s54 = scalar_select %p53, %s52, 0
    %s55 = smul.u32 2, %s54
    %s56 = sadd.s32 0, 0
    %p57 = scmp.lt.s32.totalorder %s56, 0
    %s58 = scalar_select %p57, %s56, 0
    %s59 = smul.u32 2, %s58
    %p60 = scmp.eq.s32.totalorder 0, 0
    // Predicated region
    $region18: #{tpu_custom_call.1} parent=1 // pred_check
      %p61 = pneg %p60
    $region19: #{tpu_custom_call.1} parent=1 // pred_check_branch
      %63 = sbr.rel (%p61) target = $region21
    $region20: #{tpu_custom_call.1} parent=1 // pred_region
      %64 = vst [vmem:[#allocation7] sm:$0xff] 0.0
    $region21: #{tpu_custom_call.1} parent=1 // pred_fallthru
      _
    %v65 = vld [vmem:[#allocation7] sm:$0xff]
    %v66 = vld [vmem:[#allocation2] sm:$0xff]
    %v67 = vld [vmem:[#allocation2 + $0x8] sm:$0xff]
    %v68 = vld [vmem:[#allocation5] sm:$0xff]
    %v69 = vld [vmem:[#allocation5 + $0x8] sm:$0xff]
    %v70 = vsub.f32 %v66, %v68
    %v71 = vsub.f32 %v67, %v69
    %v72 = vmul.f32 %v70, %v70
    %v73 = vmul.f32 %v71, %v71
    %vm74 = vcmp.eq.f32.partialorder %v68, 0.0
    %vm75 = vcmp.eq.f32.partialorder %v69, 0.0
    %v76 = vsel %vm74, 1, 0
    %v77 = vsel %vm75, 1, 0
    %v78 = vcvt.s32.f32 %v76
    %v79 = vcvt.s32.f32 %v77
    %v80 = vmul.f32 %v78, 2.0
    %v81 = vmul.f32 %v79, 2.0
    %v82 = vadd.f32 %v80, 1.0
    %v83 = vadd.f32 %v81, 1.0
    %v84 = vmul.f32 %v72, %v82
    %v85 = vmul.f32 %v73, %v83
    %v86 = vadd.f32 %v84, %v85
    %v87 = vadd.f32 %v86, 0.0
    %v88 = vadd.f32 %v65, %v87
    %89 = vst [vmem:[#allocation7] sm:$0xff] %v88
    // Predicated region
    $region22: #{tpu_custom_call.1} parent=1 // pred_check
      _
    $region23: #{tpu_custom_call.1} parent=1 // pred_check_branch
      %91 = sbr.rel (0) target = $region25
    $region24: #{tpu_custom_call.1} parent=1 // pred_region
      %s93 = ssub.s32 128, 128
      %94 = vsyncadd [#allocation4], %s93
      %s96 = sshll.u32 [#allocation7], 4
      %s97 = int_to_ptr.vmem [resolvable:$true] %s96
      %99 = dma.vmem_to_hbm [thread:$0]  %s97, 128, %s2, [#allocation4]
    $region25: #{tpu_custom_call.1} parent=1 // pred_fallthru
      _
    // Predicated region
    $region26: #{tpu_custom_call.1} parent=1 // pred_check
      _
    $region27: #{tpu_custom_call.1} parent=1 // pred_check_branch
      %101 = sbr.rel (0) target = $region29
    $region28: #{tpu_custom_call.1} parent=1 // pred_region
      %102 = dma.done [#allocation4], 128
    $region29: #{tpu_custom_call.1} parent=1 // pred_fallthru
      _
    %103 = vsyncpa [#allocation3], 1
    %104 = vsyncpa [#allocation6], 1
    %105 = vsyncpa [#allocation4], 1

</llo_original>
